<compile_context>
chip_gen: v7x
topology: tpu7x:2x2x1
jax: 0.10.0
libtpu: 0.0.40
codegen_flags: <defaults>
</compile_context>

<pallas_src>
import functools

import numpy as np

import jax
import jax.numpy as jnp
from jax.experimental import pallas as pl
from jax.experimental.pallas import tpu as pltpu

LN_EPS = 1e-5
_LANE = 128
_SUBLANE = 8
_VMEM_BUDGET = 24 * 1024 * 1024  # conservative working budget (fits v7x/v5e)


def _round_up(v, m):
    return (v + m - 1) // m * m


def _ffn_kernel(x_ref, gamma_ref, beta_ref, w1_ref, b1_ref, w2_ref, b2_ref,
                o_ref, *, f_valid, matmul_dtype):
    # x_ref: (TR, Fp) lane-dense row tile; params are full (grid-invariant).
    x = x_ref[...].astype(jnp.float32)
    tr, f_pad = x.shape

    # --- LayerNorm over the (real) feature axis; padded lanes hold zeros ---
    inv_f = jnp.float32(1.0 / f_valid)
    mean = jnp.sum(x, axis=-1, keepdims=True) * inv_f      # zeros don't bias sum
    centered = x - mean
    if f_valid != f_pad:
        lane = jax.lax.broadcasted_iota(jnp.int32, (tr, f_pad), 1)
        centered = jnp.where(lane < f_valid, centered, 0.0)
    var = jnp.sum(centered * centered, axis=-1, keepdims=True) * inv_f
    xn = centered * jax.lax.rsqrt(var + LN_EPS)
    xn = xn * gamma_ref[...] + beta_ref[...]   # padded lanes: gamma=beta=0 -> 0

    # --- linear_ff: bf16 MXU matmul, f32 accumulate ---
    h = jnp.dot(xn.astype(matmul_dtype), w1_ref[...],
                preferred_element_type=jnp.float32)
    h = h + b1_ref[...]

    # --- SiLU (f32 on VPU/EUP) ---
    h = h * jax.nn.sigmoid(h)

    # TODO(synk): dropout is identity here (eval mode); training-mode dropout
    # would need pltpu.prng_seed / pltpu.prng_random_bits.

    # --- linear_out: bf16 MXU matmul, f32 accumulate ---
    y = jnp.dot(h.astype(matmul_dtype), w2_ref[...],
                preferred_element_type=jnp.float32)
    y = y + b2_ref[...]

    o_ref[...] = y.astype(o_ref.dtype)


@functools.partial(
    jax.jit,
    static_argnames=("row_tile", "matmul_dtype", "single_buffer_params"))
def _ffn_impl(x, gamma, beta, w1, b1, w2, b2, *, row_tile, matmul_dtype,
              single_buffer_params):
    B, T, F = x.shape
    H = w1.shape[1]
    rows = B * T

    f_pad = _round_up(F, _LANE)
    h_pad = _round_up(H, _LANE)

    x_itemsize = x.dtype.itemsize
    mm_itemsize = np.dtype(matmul_dtype).itemsize

    # ---- pick an MXU-aligned row tile that fits the VMEM budget ----
    rt = min(row_tile, _round_up(rows, _SUBLANE))
    rt = max(_SUBLANE, _round_up(rt, _SUBLANE))

    def vmem_estimate(rt_):
        tiles = 2 * (rt_ * f_pad * x_itemsize) * 2        # x + out, double buffered
        weights = 2 * 2 * f_pad * h_pad * mm_itemsize     # W_ff + W_out (worst case)
        params = 2 * (3 * f_pad + h_pad) * 4              # gamma/beta/biases
        interm = rt_ * (h_pad + 2 * f_pad) * 4            # f32 working values
        return tiles + weights + params + interm

    while rt > 128 and vmem_estimate(rt) > _VMEM_BUDGET:
        rt = max(128, rt // 2)

    rows_pad = _round_up(rows, rt)
    grid = (rows_pad // rt,)

    # ---- zero-pad operands to lane-dense shapes (keeps the math exact) ----
    x2d = x.reshape(rows, F)
    x2d = jnp.pad(x2d, ((0, rows_pad - rows), (0, f_pad - F)))
    gamma_p = jnp.pad(gamma.astype(jnp.float32), (0, f_pad - F)).reshape(1, f_pad)
    beta_p = jnp.pad(beta.astype(jnp.float32), (0, f_pad - F)).reshape(1, f_pad)
    w1_p = jnp.pad(w1, ((0, f_pad - F), (0, h_pad - H))).astype(matmul_dtype)
    b1_p = jnp.pad(b1.astype(jnp.float32), (0, h_pad - H)).reshape(1, h_pad)
    w2_p = jnp.pad(w2, ((0, h_pad - H), (0, f_pad - F))).astype(matmul_dtype)
    b2_p = jnp.pad(b2.astype(jnp.float32), (0, f_pad - F)).reshape(1, f_pad)

    # ---- BlockSpecs ----
    if single_buffer_params:
        # Grid-invariant operands: one VMEM buffer instead of the default two.
        param_kw = dict(pipeline_mode=pl.Buffered(1))
    else:
        param_kw = {}

    const = lambda i: (0, 0)
    in_specs = [
        pl.BlockSpec((rt, f_pad), lambda i: (i, 0)),        # x rows
        pl.BlockSpec((1, f_pad), const, **param_kw),        # gamma
        pl.BlockSpec((1, f_pad), const, **param_kw),        # beta
        pl.BlockSpec((f_pad, h_pad), const, **param_kw),    # W_ff
        pl.BlockSpec((1, h_pad), const, **param_kw),        # b_ff
        pl.BlockSpec((h_pad, f_pad), const, **param_kw),    # W_out
        pl.BlockSpec((1, f_pad), const, **param_kw),        # b_out
    ]
    out_spec = pl.BlockSpec((rt, f_pad), lambda i: (i, 0))

    # ---- scheduler hints ----
    flops = 2 * 2 * rows_pad * f_pad * h_pad + 10 * rows_pad * f_pad
    transcendentals = rows_pad * h_pad
    bytes_accessed = (2 * rows_pad * f_pad * x_itemsize
                      + 2 * f_pad * h_pad * mm_itemsize
                      + (3 * f_pad + h_pad) * 4)

    est = vmem_estimate(rt)
    vmem_limit = None
    if est > 12 * 1024 * 1024:
        vmem_limit = min(int(est * 3 // 2), 40 * 1024 * 1024)

    kernel = functools.partial(_ffn_kernel, f_valid=F, matmul_dtype=matmul_dtype)

    out2d = pl.pallas_call(
        kernel,
        out_shape=jax.ShapeDtypeStruct((rows_pad, f_pad), x.dtype),
        grid_spec=pltpu.PrefetchScalarGridSpec(
            num_scalar_prefetch=0,
            grid=grid,
            in_specs=in_specs,
            out_specs=out_spec,
        ),
        compiler_params=pltpu.CompilerParams(
            dimension_semantics=("parallel",),
            vmem_limit_bytes=vmem_limit),
        cost_estimate=pl.CostEstimate(
            flops=flops,
            transcendentals=transcendentals,
            bytes_accessed=bytes_accessed),
    )(x2d, gamma_p, beta_p, w1_p, b1_p, w2_p, b2_p)

    return out2d[:rows, :F].reshape(B, T, F)


def conformer_ffn(x, gamma, beta, w1, b1, w2, b2, *, row_tile=256,
                  matmul_dtype=jnp.bfloat16):
    """x: [B, T, F]; w1: [F, H]; w2: [H, F]; returns [B, T, F]."""
    try:
        return _ffn_impl(x, gamma, beta, w1, b1, w2, b2,
                         row_tile=row_tile, matmul_dtype=matmul_dtype,
                         single_buffer_params=True)
    except Exception:
        # pipeline_mode=pl.Buffered(1) not supported by this jax version:
        # fall back to default double-buffering of the grid-invariant params.
        return _ffn_impl(x, gamma, beta, w1, b1, w2, b2,
                         row_tile=row_tile, matmul_dtype=matmul_dtype,
                         single_buffer_params=False)


def _reference(x, gamma, beta, w1, b1, w2, b2, matmul_dtype=jnp.float32):
    xf = x.astype(jnp.float32)
    mean = jnp.mean(xf, axis=-1, keepdims=True)
    var = jnp.mean((xf - mean) ** 2, axis=-1, keepdims=True)
    xn = (xf - mean) * jax.lax.rsqrt(var + LN_EPS) * gamma + beta
    h = jnp.dot(xn.astype(matmul_dtype), w1.astype(matmul_dtype),
                preferred_element_type=jnp.float32) + b1
    h = h * jax.nn.sigmoid(h)
    y = jnp.dot(h.astype(matmul_dtype), w2.astype(matmul_dtype),
                preferred_element_type=jnp.float32) + b2
    return y.astype(x.dtype)


if __name__ == "__main__":
    # Config: input_dim=32, hidden_dim=128 (4x), dropout identity (eval mode).
    B, T, F, H = 2, 8, 32, 128

    key = jax.random.PRNGKey(0)
    kx, kg, kb, kw1, kb1, kw2, kb2 = jax.random.split(key, 7)

    x = jax.random.normal(kx, (B, T, F), dtype=jnp.float32)

    # LayerNorm params (torch init gamma=1, beta=0; perturbed deterministically
    # to make the check non-trivial).
    gamma = jnp.ones((F,), jnp.float32) + 0.1 * jax.random.normal(kg, (F,))
    beta = 0.1 * jax.random.normal(kb, (F,), dtype=jnp.float32)

    # Linear weights stored transposed vs torch (in, out) so the kernel
    # computes x @ W + b (== torch x @ W_t.T + b).
    w1 = jax.random.normal(kw1, (F, H), dtype=jnp.float32) / jnp.sqrt(F)
    b1 = 0.02 * jax.random.normal(kb1, (H,), dtype=jnp.float32)
    w2 = jax.random.normal(kw2, (H, F), dtype=jnp.float32) / jnp.sqrt(H)
    b2 = 0.02 * jax.random.normal(kb2, (F,), dtype=jnp.float32)

    out = conformer_ffn(x, gamma, beta, w1, b1, w2, b2)
    out = jax.block_until_ready(out)

    # Reference uses the same bf16 matmul precision as the kernel.
    ref = _reference(x, gamma, beta, w1, b1, w2, b2, matmul_dtype=jnp.bfloat16)
    assert out.shape == (B, T, F)
    assert jnp.allclose(out, ref, atol=2e-2, rtol=2e-2), "mismatch vs reference"

    print("KERNEL_OK")
</pallas_src>

<mosaic_0001>
module attributes {stable_mosaic.version = 11 : i64} {
  func.func @_ffn_kernel(%arg0: i32, %arg1: memref<16x128xf32, #tpu.memory_space<vmem>>, %arg2: memref<1x128xf32, #tpu.memory_space<vmem>>, %arg3: memref<1x128xf32, #tpu.memory_space<vmem>>, %arg4: memref<128x128xbf16, #tpu.memory_space<vmem>>, %arg5: memref<1x128xf32, #tpu.memory_space<vmem>>, %arg6: memref<128x128xbf16, #tpu.memory_space<vmem>>, %arg7: memref<1x128xf32, #tpu.memory_space<vmem>>, %arg8: memref<16x128xf32, #tpu.memory_space<vmem>>) attributes {dimension_semantics = [#tpu.dimension_semantics<parallel>], iteration_bounds = array<i64: 1>, scalar_prefetch = 0 : i64, scratch_operands = 0 : i64, tpu.core_type = #tpu.core_type<tc>, window_params = [{transform_indices = @transform_0, window_bounds = array<i64: 16, 128>}, {pipeline_mode = #tpu.pipeline_mode<synchronous>, transform_indices = @transform_1, window_bounds = array<i64: 1, 128>}, {pipeline_mode = #tpu.pipeline_mode<synchronous>, transform_indices = @transform_2, window_bounds = array<i64: 1, 128>}, {pipeline_mode = #tpu.pipeline_mode<synchronous>, transform_indices = @transform_3, window_bounds = array<i64: 128, 128>}, {pipeline_mode = #tpu.pipeline_mode<synchronous>, transform_indices = @transform_4, window_bounds = array<i64: 1, 128>}, {pipeline_mode = #tpu.pipeline_mode<synchronous>, transform_indices = @transform_5, window_bounds = array<i64: 128, 128>}, {pipeline_mode = #tpu.pipeline_mode<synchronous>, transform_indices = @transform_6, window_bounds = array<i64: 1, 128>}, {transform_indices = @transform_7, window_bounds = array<i64: 16, 128>}]} {
    %c0 = arith.constant 0 : index
    %c0_0 = arith.constant 0 : index
    %0 = vector.load %arg1[%c0, %c0_0] : memref<16x128xf32, #tpu.memory_space<vmem>>, vector<16x128xf32>
    %cst = arith.constant dense<0.000000e+00> : vector<16xf32>
    %1 = vector.multi_reduction <add>, %0, %cst [1] : vector<16x128xf32> to vector<16xf32>
    %2 = vector.shape_cast %1 : vector<16xf32> to vector<16x1xf32>
    %cst_1 = arith.constant 3.125000e-02 : f32
    %3 = vector.broadcast %cst_1 : f32 to vector<16x1xf32>
    %4 = arith.mulf %2, %3 : vector<16x1xf32>
    %5 = vector.broadcast %4 : vector<16x1xf32> to vector<16x128xf32>
    %6 = arith.subf %0, %5 : vector<16x128xf32>
    %7 = tpu.iota {dimensions = array<i32: 1>} : vector<16x128xi32>
    %c32_i32 = arith.constant 32 : i32
    %8 = vector.broadcast %c32_i32 : i32 to vector<16x128xi32>
    %9 = arith.cmpi slt, %7, %8 : vector<16x128xi32>
    %cst_2 = arith.constant 0.000000e+00 : f32
    %10 = vector.broadcast %cst_2 : f32 to vector<16x128xf32>
    %11 = arith.select %9, %6, %10 : vector<16x128xi1>, vector<16x128xf32>
    %12 = arith.mulf %11, %11 : vector<16x128xf32>
    %cst_3 = arith.constant dense<0.000000e+00> : vector<16xf32>
    %13 = vector.multi_reduction <add>, %12, %cst_3 [1] : vector<16x128xf32> to vector<16xf32>
    %14 = vector.shape_cast %13 : vector<16xf32> to vector<16x1xf32>
    %cst_4 = arith.constant 3.125000e-02 : f32
    %15 = vector.broadcast %cst_4 : f32 to vector<16x1xf32>
    %16 = arith.mulf %14, %15 : vector<16x1xf32>
    %cst_5 = arith.constant 9.99999974E-6 : f32
    %17 = vector.broadcast %cst_5 : f32 to vector<16x1xf32>
    %18 = arith.addf %16, %17 : vector<16x1xf32>
    %19 = math.rsqrt %18 : vector<16x1xf32>
    %20 = vector.broadcast %19 : vector<16x1xf32> to vector<16x128xf32>
    %21 = arith.mulf %11, %20 : vector<16x128xf32>
    %c0_6 = arith.constant 0 : index
    %c0_7 = arith.constant 0 : index
    %22 = vector.load %arg2[%c0_6, %c0_7] : memref<1x128xf32, #tpu.memory_space<vmem>>, vector<1x128xf32>
    %23 = vector.broadcast %22 : vector<1x128xf32> to vector<16x128xf32>
    %24 = arith.mulf %21, %23 : vector<16x128xf32>
    %c0_8 = arith.constant 0 : index
    %c0_9 = arith.constant 0 : index
    %25 = vector.load %arg3[%c0_8, %c0_9] : memref<1x128xf32, #tpu.memory_space<vmem>>, vector<1x128xf32>
    %26 = vector.broadcast %25 : vector<1x128xf32> to vector<16x128xf32>
    %27 = arith.addf %24, %26 : vector<16x128xf32>
    %28 = arith.truncf %27 : vector<16x128xf32> to vector<16x128xbf16>
    %c0_10 = arith.constant 0 : index
    %c0_11 = arith.constant 0 : index
    %29 = vector.load %arg4[%c0_10, %c0_11] : memref<128x128xbf16, #tpu.memory_space<vmem>>, vector<128x128xbf16>
    %cst_12 = arith.constant dense<0.000000e+00> : vector<16x128xf32>
    %30 = tpu.matmul %28, %29, %cst_12 {dimension_numbers = #tpu.dot_dimension_numbers<[1], [0], [0], [1], [0, 0, 1, 1], [], []>} : vector<16x128xbf16>, vector<128x128xbf16>, vector<16x128xf32> -> vector<16x128xf32>
    %c0_13 = arith.constant 0 : index
    %c0_14 = arith.constant 0 : index
    %31 = vector.load %arg5[%c0_13, %c0_14] : memref<1x128xf32, #tpu.memory_space<vmem>>, vector<1x128xf32>
    %32 = vector.broadcast %31 : vector<1x128xf32> to vector<16x128xf32>
    %33 = arith.addf %30, %32 : vector<16x128xf32>
    %34 = arith.negf %33 : vector<16x128xf32>
    %35 = math.exp %34 : vector<16x128xf32>
    %cst_15 = arith.constant 1.000000e+00 : f32
    %36 = vector.broadcast %cst_15 : f32 to vector<16x128xf32>
    %37 = arith.addf %36, %35 : vector<16x128xf32>
    %38 = arith.divf %36, %37 : vector<16x128xf32>
    %39 = arith.mulf %33, %38 : vector<16x128xf32>
    %40 = arith.truncf %39 : vector<16x128xf32> to vector<16x128xbf16>
    %c0_16 = arith.constant 0 : index
    %c0_17 = arith.constant 0 : index
    %41 = vector.load %arg6[%c0_16, %c0_17] : memref<128x128xbf16, #tpu.memory_space<vmem>>, vector<128x128xbf16>
    %cst_18 = arith.constant dense<0.000000e+00> : vector<16x128xf32>
    %42 = tpu.matmul %40, %41, %cst_18 {dimension_numbers = #tpu.dot_dimension_numbers<[1], [0], [0], [1], [0, 0, 1, 1], [], []>} : vector<16x128xbf16>, vector<128x128xbf16>, vector<16x128xf32> -> vector<16x128xf32>
    %c0_19 = arith.constant 0 : index
    %c0_20 = arith.constant 0 : index
    %43 = vector.load %arg7[%c0_19, %c0_20] : memref<1x128xf32, #tpu.memory_space<vmem>>, vector<1x128xf32>
    %44 = vector.broadcast %43 : vector<1x128xf32> to vector<16x128xf32>
    %45 = arith.addf %42, %44 : vector<16x128xf32>
    %c0_21 = arith.constant 0 : index
    %c0_22 = arith.constant 0 : index
    %46 = vector.load %arg8[%c0_21, %c0_22] : memref<16x128xf32, #tpu.memory_space<vmem>>, vector<16x128xf32>
    tpu.vector_store %arg8[%c0_21, %c0_22], %45 {strides = array<i32>} : memref<16x128xf32, #tpu.memory_space<vmem>>, vector<16x128xf32>,
    return
  }
  func.func @transform_0(%arg0: i32) -> (i32, i32) {
    %c0_i32 = arith.constant 0 : i32
    %c0_i32_0 = arith.constant 0 : i32
    return %arg0, %c0_i32 : i32, i32
  }
  func.func @transform_1(%arg0: i32) -> (i32, i32) {
    %c0_i32 = arith.constant 0 : i32
    %c0_i32_0 = arith.constant 0 : i32
    %c0_i32_1 = arith.constant 0 : i32
    return %c0_i32, %c0_i32_0 : i32, i32
  }
  func.func @transform_2(%arg0: i32) -> (i32, i32) {
    %c0_i32 = arith.constant 0 : i32
    %c0_i32_0 = arith.constant 0 : i32
    %c0_i32_1 = arith.constant 0 : i32
    return %c0_i32, %c0_i32_0 : i32, i32
  }
  func.func @transform_3(%arg0: i32) -> (i32, i32) {
    %c0_i32 = arith.constant 0 : i32
    %c0_i32_0 = arith.constant 0 : i32
    %c0_i32_1 = arith.constant 0 : i32
    return %c0_i32, %c0_i32_0 : i32, i32
  }
  func.func @transform_4(%arg0: i32) -> (i32, i32) {
    %c0_i32 = arith.constant 0 : i32
    %c0_i32_0 = arith.constant 0 : i32
    %c0_i32_1 = arith.constant 0 : i32
    return %c0_i32, %c0_i32_0 : i32, i32
  }
  func.func @transform_5(%arg0: i32) -> (i32, i32) {
    %c0_i32 = arith.constant 0 : i32
    %c0_i32_0 = arith.constant 0 : i32
    %c0_i32_1 = arith.constant 0 : i32
    return %c0_i32, %c0_i32_0 : i32, i32
  }
  func.func @transform_6(%arg0: i32) -> (i32, i32) {
    %c0_i32 = arith.constant 0 : i32
    %c0_i32_0 = arith.constant 0 : i32
    %c0_i32_1 = arith.constant 0 : i32
    return %c0_i32, %c0_i32_0 : i32, i32
  }
  func.func @transform_7(%arg0: i32) -> (i32, i32) {
    %c0_i32 = arith.constant 0 : i32
    %c0_i32_0 = arith.constant 0 : i32
    return %arg0, %c0_i32 : i32, i32
  }
}

module attributes {stable_mosaic.version = 11 : i64} {
  func.func @_ffn_kernel(%arg0: i32, %arg1: memref<16x128xf32, #tpu.memory_space<vmem>>, %arg2: memref<1x128xf32, #tpu.memory_space<vmem>>, %arg3: memref<1x128xf32, #tpu.memory_space<vmem>>, %arg4: memref<128x128xbf16, #tpu.memory_space<vmem>>, %arg5: memref<1x128xf32, #tpu.memory_space<vmem>>, %arg6: memref<128x128xbf16, #tpu.memory_space<vmem>>, %arg7: memref<1x128xf32, #tpu.memory_space<vmem>>, %arg8: memref<16x128xf32, #tpu.memory_space<vmem>>) attributes {dimension_semantics = [#tpu.dimension_semantics<parallel>], iteration_bounds = array<i64: 1>, scalar_prefetch = 0 : i64, scratch_operands = 0 : i64, tpu.core_type = #tpu.core_type<tc>, window_params = [{transform_indices = @transform_0, window_bounds = array<i64: 16, 128>}, {pipeline_mode = #tpu.pipeline_mode<synchronous>, transform_indices = @transform_1, window_bounds = array<i64: 1, 128>}, {pipeline_mode = #tpu.pipeline_mode<synchronous>, transform_indices = @transform_2, window_bounds = array<i64: 1, 128>}, {pipeline_mode = #tpu.pipeline_mode<synchronous>, transform_indices = @transform_3, window_bounds = array<i64: 128, 128>}, {pipeline_mode = #tpu.pipeline_mode<synchronous>, transform_indices = @transform_4, window_bounds = array<i64: 1, 128>}, {pipeline_mode = #tpu.pipeline_mode<synchronous>, transform_indices = @transform_5, window_bounds = array<i64: 128, 128>}, {pipeline_mode = #tpu.pipeline_mode<synchronous>, transform_indices = @transform_6, window_bounds = array<i64: 1, 128>}, {transform_indices = @transform_7, window_bounds = array<i64: 16, 128>}]} {
    %c0 = arith.constant 0 : index
    %c0_0 = arith.constant 0 : index
    %0 = vector.load %arg1[%c0, %c0_0] : memref<16x128xf32, #tpu.memory_space<vmem>>, vector<16x128xf32>
    %cst = arith.constant dense<0.000000e+00> : vector<16xf32>
    %1 = vector.multi_reduction <add>, %0, %cst [1] : vector<16x128xf32> to vector<16xf32>
    %2 = vector.shape_cast %1 : vector<16xf32> to vector<16x1xf32>
    %cst_1 = arith.constant 3.125000e-02 : f32
    %3 = vector.broadcast %cst_1 : f32 to vector<16x1xf32>
    %4 = arith.mulf %2, %3 : vector<16x1xf32>
    %5 = vector.broadcast %4 : vector<16x1xf32> to vector<16x128xf32>
    %6 = arith.subf %0, %5 : vector<16x128xf32>
    %7 = tpu.iota {dimensions = array<i32: 1>} : vector<16x128xi32>
    %c32_i32 = arith.constant 32 : i32
    %8 = vector.broadcast %c32_i32 : i32 to vector<16x128xi32>
    %9 = arith.cmpi slt, %7, %8 : vector<16x128xi32>
    %cst_2 = arith.constant 0.000000e+00 : f32
    %10 = vector.broadcast %cst_2 : f32 to vector<16x128xf32>
    %11 = arith.select %9, %6, %10 : vector<16x128xi1>, vector<16x128xf32>
    %12 = arith.mulf %11, %11 : vector<16x128xf32>
    %cst_3 = arith.constant dense<0.000000e+00> : vector<16xf32>
    %13 = vector.multi_reduction <add>, %12, %cst_3 [1] : vector<16x128xf32> to vector<16xf32>
    %14 = vector.shape_cast %13 : vector<16xf32> to vector<16x1xf32>
    %cst_4 = arith.constant 3.125000e-02 : f32
    %15 = vector.broadcast %cst_4 : f32 to vector<16x1xf32>
    %16 = arith.mulf %14, %15 : vector<16x1xf32>
    %cst_5 = arith.constant 9.99999974E-6 : f32
    %17 = vector.broadcast %cst_5 : f32 to vector<16x1xf32>
    %18 = arith.addf %16, %17 : vector<16x1xf32>
    %19 = math.rsqrt %18 : vector<16x1xf32>
    %20 = vector.broadcast %19 : vector<16x1xf32> to vector<16x128xf32>
    %21 = arith.mulf %11, %20 : vector<16x128xf32>
    %c0_6 = arith.constant 0 : index
    %c0_7 = arith.constant 0 : index
    %22 = vector.load %arg2[%c0_6, %c0_7] : memref<1x128xf32, #tpu.memory_space<vmem>>, vector<1x128xf32>
    %23 = vector.broadcast %22 : vector<1x128xf32> to vector<16x128xf32>
    %24 = arith.mulf %21, %23 : vector<16x128xf32>
    %c0_8 = arith.constant 0 : index
    %c0_9 = arith.constant 0 : index
    %25 = vector.load %arg3[%c0_8, %c0_9] : memref<1x128xf32, #tpu.memory_space<vmem>>, vector<1x128xf32>
    %26 = vector.broadcast %25 : vector<1x128xf32> to vector<16x128xf32>
    %27 = arith.addf %24, %26 : vector<16x128xf32>
    %28 = arith.truncf %27 : vector<16x128xf32> to vector<16x128xbf16>
    %c0_10 = arith.constant 0 : index
    %c0_11 = arith.constant 0 : index
    %29 = vector.load %arg4[%c0_10, %c0_11] : memref<128x128xbf16, #tpu.memory_space<vmem>>, vector<128x128xbf16>
    %cst_12 = arith.constant dense<0.000000e+00> : vector<16x128xf32>
    %30 = tpu.matmul %28, %29, %cst_12 {dimension_numbers = #tpu.dot_dimension_numbers<[1], [0], [0], [1], [0, 0, 1, 1], [], []>} : vector<16x128xbf16>, vector<128x128xbf16>, vector<16x128xf32> -> vector<16x128xf32>
    %c0_13 = arith.constant 0 : index
    %c0_14 = arith.constant 0 : index
    %31 = vector.load %arg5[%c0_13, %c0_14] : memref<1x128xf32, #tpu.memory_space<vmem>>, vector<1x128xf32>
    %32 = vector.broadcast %31 : vector<1x128xf32> to vector<16x128xf32>
    %33 = arith.addf %30, %32 : vector<16x128xf32>
    %34 = arith.negf %33 : vector<16x128xf32>
    %35 = math.exp %34 : vector<16x128xf32>
    %cst_15 = arith.constant 1.000000e+00 : f32
    %36 = vector.broadcast %cst_15 : f32 to vector<16x128xf32>
    %37 = arith.addf %36, %35 : vector<16x128xf32>
    %38 = arith.divf %36, %37 : vector<16x128xf32>
    %39 = arith.mulf %33, %38 : vector<16x128xf32>
    %40 = arith.truncf %39 : vector<16x128xf32> to vector<16x128xbf16>
    %c0_16 = arith.constant 0 : index
    %c0_17 = arith.constant 0 : index
    %41 = vector.load %arg6[%c0_16, %c0_17] : memref<128x128xbf16, #tpu.memory_space<vmem>>, vector<128x128xbf16>
    %cst_18 = arith.constant dense<0.000000e+00> : vector<16x128xf32>
    %42 = tpu.matmul %40, %41, %cst_18 {dimension_numbers = #tpu.dot_dimension_numbers<[1], [0], [0], [1], [0, 0, 1, 1], [], []>} : vector<16x128xbf16>, vector<128x128xbf16>, vector<16x128xf32> -> vector<16x128xf32>
    %c0_19 = arith.constant 0 : index
    %c0_20 = arith.constant 0 : index
    %43 = vector.load %arg7[%c0_19, %c0_20] : memref<1x128xf32, #tpu.memory_space<vmem>>, vector<1x128xf32>
    %44 = vector.broadcast %43 : vector<1x128xf32> to vector<16x128xf32>
    %45 = arith.addf %42, %44 : vector<16x128xf32>
    %c0_21 = arith.constant 0 : index
    %c0_22 = arith.constant 0 : index
    %46 = vector.load %arg8[%c0_21, %c0_22] : memref<16x128xf32, #tpu.memory_space<vmem>>, vector<16x128xf32>
    tpu.vector_store %arg8[%c0_21, %c0_22], %45 {strides = array<i32>} : memref<16x128xf32, #tpu.memory_space<vmem>>, vector<16x128xf32>,
    return
  }
  func.func @transform_0(%arg0: i32) -> (i32, i32) {
    %c0_i32 = arith.constant 0 : i32
    %c0_i32_0 = arith.constant 0 : i32
    return %arg0, %c0_i32 : i32, i32
  }
  func.func @transform_1(%arg0: i32) -> (i32, i32) {
    %c0_i32 = arith.constant 0 : i32
    %c0_i32_0 = arith.constant 0 : i32
    %c0_i32_1 = arith.constant 0 : i32
    return %c0_i32, %c0_i32_0 : i32, i32
  }
  func.func @transform_2(%arg0: i32) -> (i32, i32) {
    %c0_i32 = arith.constant 0 : i32
    %c0_i32_0 = arith.constant 0 : i32
    %c0_i32_1 = arith.constant 0 : i32
    return %c0_i32, %c0_i32_0 : i32, i32
  }
  func.func @transform_3(%arg0: i32) -> (i32, i32) {
    %c0_i32 = arith.constant 0 : i32
    %c0_i32_0 = arith.constant 0 : i32
    %c0_i32_1 = arith.constant 0 : i32
    return %c0_i32, %c0_i32_0 : i32, i32
  }
  func.func @transform_4(%arg0: i32) -> (i32, i32) {
    %c0_i32 = arith.constant 0 : i32
    %c0_i32_0 = arith.constant 0 : i32
    %c0_i32_1 = arith.constant 0 : i32
    return %c0_i32, %c0_i32_0 : i32, i32
  }
  func.func @transform_5(%arg0: i32) -> (i32, i32) {
    %c0_i32 = arith.constant 0 : i32
    %c0_i32_0 = arith.constant 0 : i32
    %c0_i32_1 = arith.constant 0 : i32
    return %c0_i32, %c0_i32_0 : i32, i32
  }
  func.func @transform_6(%arg0: i32) -> (i32, i32) {
    %c0_i32 = arith.constant 0 : i32
    %c0_i32_0 = arith.constant 0 : i32
    %c0_i32_1 = arith.constant 0 : i32
    return %c0_i32, %c0_i32_0 : i32, i32
  }
  func.func @transform_7(%arg0: i32) -> (i32, i32) {
    %c0_i32 = arith.constant 0 : i32
    %c0_i32_0 = arith.constant 0 : i32
    return %arg0, %c0_i32 : i32, i32
  }
}

</mosaic_0001>

<llo_original>
// kernel: _ffn_impl.1
$region0: #{_ffn_impl.1}
  #allocation0 [shape = 'u32[]', space=smem, size = 0x4, offset = 0x4, fixed_abs, tag = 'smem constant byte address 0x4 - core index']
  #allocation1 [shape = 'u32[144,128]{1,0:T(1,128)}', space=vmem, size = 0x12000, scoped, tag = 'internal scratch']
  %s0 = inlined_call_operand.vmem [shape: f32[16,128], index: 0, kind: input, shape index: {}]
  %s1 = inlined_call_operand.vmem [shape: f32[1,128], index: 1, kind: input, shape index: {}]
  %s2 = inlined_call_operand.vmem [shape: f32[1,128], index: 2, kind: input, shape index: {}]
  %s3 = inlined_call_operand.vmem [shape: bf16[128,128], index: 3, kind: input, shape index: {}]
  %s4 = inlined_call_operand.vmem [shape: f32[1,128], index: 4, kind: input, shape index: {}]
  %s5 = inlined_call_operand.vmem [shape: bf16[128,128], index: 5, kind: input, shape index: {}]
  %s6 = inlined_call_operand.vmem [shape: f32[1,128], index: 6, kind: input, shape index: {}]
  %s7 = inlined_call_operand.vmem [shape: f32[16,128], index: 7, kind: output, shape index: {}]
  %s8 = sld [smem:[#allocation0]]
  $region38: #{_ffn_impl.1} parent=0
    _
  %s10 = ssub.s32 1, %s8
  %s11 = scalar_select 0, %s10, %s8
  // Predicated region
  $region2: #{_ffn_impl.1} parent=0 // pred_check
    _
  $region3: #{_ffn_impl.1} parent=0 // pred_check_branch
    %13 = sbr.rel (0) target = $region5
  $region4: #{_ffn_impl.1} parent=0 // pred_region
    _
  $region5: #{_ffn_impl.1} parent=0 // pred_fallthru
    _
  // Predicated region
  $region6: #{_ffn_impl.1} parent=0 // pred_check
    _
  $region7: #{_ffn_impl.1} parent=0 // pred_check_branch
    %15 = sbr.rel (0) target = $region9
  $region8: #{_ffn_impl.1} parent=0 // pred_region
    _
  $region9: #{_ffn_impl.1} parent=0 // pred_fallthru
    _
  // Predicated region
  $region10: #{_ffn_impl.1} parent=0 // pred_check
    _
  $region11: #{_ffn_impl.1} parent=0 // pred_check_branch
    %17 = sbr.rel (0) target = $region13
  $region12: #{_ffn_impl.1} parent=0 // pred_region
    _
  $region13: #{_ffn_impl.1} parent=0 // pred_fallthru
    _
  // Predicated region
  $region14: #{_ffn_impl.1} parent=0 // pred_check
    _
  $region15: #{_ffn_impl.1} parent=0 // pred_check_branch
    %19 = sbr.rel (0) target = $region17
  $region16: #{_ffn_impl.1} parent=0 // pred_region
    _
  $region17: #{_ffn_impl.1} parent=0 // pred_fallthru
    _
  // Predicated region
  $region18: #{_ffn_impl.1} parent=0 // pred_check
    _
  $region19: #{_ffn_impl.1} parent=0 // pred_check_branch
    %21 = sbr.rel (0) target = $region21
  $region20: #{_ffn_impl.1} parent=0 // pred_region
    _
  $region21: #{_ffn_impl.1} parent=0 // pred_fallthru
    _
  // Predicated region
  $region22: #{_ffn_impl.1} parent=0 // pred_check
    _
  $region23: #{_ffn_impl.1} parent=0 // pred_check_branch
    %23 = sbr.rel (0) target = $region25
  $region24: #{_ffn_impl.1} parent=0 // pred_region
    _
  $region25: #{_ffn_impl.1} parent=0 // pred_fallthru
    _
  // Predicated region
  $region26: #{_ffn_impl.1} parent=0 // pred_check
    _
  $region27: #{_ffn_impl.1} parent=0 // pred_check_branch
    %25 = sbr.rel (0) target = $region29
  $region28: #{_ffn_impl.1} parent=0 // pred_region
    _
  $region29: #{_ffn_impl.1} parent=0 // pred_fallthru
    _
  %v27 = vld [vmem:[%s0] sm:$0xff]
  %v28 = vld [vmem:[%s0 + $0x8] sm:$0xff]
  %29 = vadd.xlane.f32.xlu0 %v27
  %v30 = vpop.xlane.xlu0 %29
  %31 = vadd.xlane.f32.xlu0 %v28
  %v32 = vpop.xlane.xlu0 %31
  %v33 = vmul.f32 %v30, 0.03125
  %v34 = vmul.f32 %v32, 0.03125
  %v35 = vsub.f32 %v27, %v33
  %v36 = vsub.f32 %v28, %v34
  %v37 = vlaneseq
  %v38 = vand.u32 %v37, 127
  %vm39 = vcmp.lt.s32.totalorder %v38, 32
  %v40 = vsel %vm39, %v35, 0.0
  %v41 = vsel %vm39, %v36, 0.0
  %v42 = vmul.f32 %v40, %v40
  %v43 = vmul.f32 %v41, %v41
  %44 = vadd.xlane.f32.xlu0 %v42
  %v45 = vpop.xlane.xlu0 %44
  %46 = vadd.xlane.f32.xlu0 %v43
  %v47 = vpop.xlane.xlu0 %46
  %v48 = vmul.f32 %v45, 0.03125
  %v49 = vmul.f32 %v47, 0.03125
  %v50 = vadd.f32 %v48, 1e-05
  %v51 = vadd.f32 %v49, 1e-05
  %v52 = vrsqrt.pop %v50
  %v53 = vrsqrt.pop %v51
  %v54 = vmul.f32 %v40, %v52
  %v55 = vmul.f32 %v41, %v53
  %v56 = vld [vmem:[%s1] sm:$0x1]
  %v58 = vlaneseq
  %v59 = vshrl.u32 %v58, 7
  %v60 = vsub.s32 0, %v59
  %v61 = vrot.slane %v56, %v60
  %v63 = vmul.f32 %v54, %v61
  %v64 = vmul.f32 %v55, %v61
  %v65 = vld [vmem:[%s2] sm:$0x1]
  %v67 = vlaneseq
  %v68 = vshrl.u32 %v67, 7
  %v69 = vsub.s32 0, %v68
  %v70 = vrot.slane %v65, %v69
  %v72 = vadd.f32 %v63, %v70
  %v73 = vadd.f32 %v64, %v70
  %v74 = vpack.c.bf16 %v73, %v72
  %v75 = vld [vmem:[%s3] sm:$0xf]
  %v76 = vld [vmem:[%s3 + $0x4] sm:$0xf]
  %v77 = vld [vmem:[%s3 + $0x8] sm:$0xf]
  %v78 = vld [vmem:[%s3 + $0xc] sm:$0xf]
  %v79 = vld [vmem:[%s3 + $0x10] sm:$0xf]
  %v80 = vld [vmem:[%s3 + $0x14] sm:$0xf]
  %v81 = vld [vmem:[%s3 + $0x18] sm:$0xf]
  %v82 = vld [vmem:[%s3 + $0x1c] sm:$0xf]
  %v83 = vld [vmem:[%s3 + $0x20] sm:$0xf]
  %v84 = vld [vmem:[%s3 + $0x24] sm:$0xf]
  %v85 = vld [vmem:[%s3 + $0x28] sm:$0xf]
  %v86 = vld [vmem:[%s3 + $0x2c] sm:$0xf]
  %v87 = vld [vmem:[%s3 + $0x30] sm:$0xf]
  %v88 = vld [vmem:[%s3 + $0x34] sm:$0xf]
  %v89 = vld [vmem:[%s3 + $0x38] sm:$0xf]
  %v90 = vld [vmem:[%s3 + $0x3c] sm:$0xf]
  %v91 = vld [vmem:[%s4] sm:$0x1]
  %v93 = vlaneseq
  %v94 = vshrl.u32 %v93, 7
  %v95 = vsub.s32 0, %v94
  %v96 = vrot.slane %v91, %v95
  %v114 = vunpack.c.l.b16 %v75
  %v115 = vunpack.c.l.b16 %v76
  %v116 = vunpack.c.l.b16 %v77
  %v117 = vunpack.c.l.b16 %v78
  %v118 = vunpack.c.l.b16 %v79
  %v119 = vunpack.c.l.b16 %v80
  %v120 = vunpack.c.l.b16 %v81
  %v121 = vunpack.c.l.b16 %v82
  %v122 = vunpack.c.l.b16 %v83
  %v123 = vunpack.c.l.b16 %v84
  %v124 = vunpack.c.l.b16 %v85
  %v125 = vunpack.c.l.b16 %v86
  %v126 = vunpack.c.l.b16 %v87
  %v127 = vunpack.c.l.b16 %v88
  %v128 = vunpack.c.l.b16 %v89
  %v129 = vunpack.c.l.b16 %v90
  %v130 = vpack.c.b16 %v115, %v114
  %v131 = vpack.c.b16 %v117, %v116
  %v132 = vpack.c.b16 %v119, %v118
  %v133 = vpack.c.b16 %v121, %v120
  %v134 = vpack.c.b16 %v123, %v122
  %v135 = vpack.c.b16 %v125, %v124
  %v136 = vpack.c.b16 %v127, %v126
  %v137 = vpack.c.b16 %v129, %v128
  %146 = vmatprep.subr.bf16.mxu0 0
  %147 = vmatpush1.bf16.msra.mxu0 %v130
  %148 = vmatprep.subr.bf16.mxu0 0
  %149 = vmatpush1.bf16.msra.mxu0 %v131
  %150 = vmatprep.subr.bf16.mxu0 0
  %151 = vmatpush1.bf16.msra.mxu0 %v132
  %152 = vmatprep.subr.bf16.mxu0 0
  %153 = vmatpush1.bf16.msra.mxu0 %v133
  %154 = vmatprep.subr.bf16.mxu0 0
  %155 = vmatpush1.bf16.msra.mxu0 %v134
  %156 = vmatprep.subr.bf16.mxu0 0
  %157 = vmatpush1.bf16.msra.mxu0 %v135
  %158 = vmatprep.subr.bf16.mxu0 0
  %159 = vmatpush1.bf16.msra.mxu0 %v136
  %160 = vmatprep.subr.bf16.mxu0 0
  %161 = vmatpush1.bf16.msra.mxu0 %v137
  %162 = vmatprep.subr.bf16.mxu0 0
  %163 = vmatpush1.bf16.msra.mxu0 0
  %164 = vmatprep.subr.bf16.mxu0 0
  %165 = vmatpush1.bf16.msra.mxu0 0
  %166 = vmatprep.subr.bf16.mxu0 0
  %167 = vmatpush1.bf16.msra.mxu0 0
  %168 = vmatprep.subr.bf16.mxu0 0
  %169 = vmatpush1.bf16.msra.mxu0 0
  %170 = vmatprep.subr.bf16.mxu0 0
  %171 = vmatpush1.bf16.msra.mxu0 0
  %172 = vmatprep.subr.bf16.mxu0 0
  %173 = vmatpush1.bf16.msra.mxu0 0
  %174 = vmatprep.subr.bf16.mxu0 0
  %175 = vmatpush1.bf16.msra.mxu0 0
  %176 = vmatprep.subr.bf16.mxu0 0
  %177 = vmatpush1.bf16.msra.mxu0 0
  %178 = vmatprep.mubr.bf16.mxu0 0
  %179 = vmatmul.mubr.bf16.gmra.mrb[0].mxu0 %v74
  %v180 = vpop.f32.mrb[0].mxu0
  %v181 = vadd.f32 %v96, %v180
  %v182 = vpop.f32.mrb[0].mxu0
  %v183 = vpop.f32.mrb[0].mxu0
  %v184 = vadd.f32 %v96, %v183
  %v185 = vpop.f32.mrb[0].mxu0
  %186 = vdwg.mxu0
  %v187 = vxor.u32 %v181, 2147483648
  %v188 = vxor.u32 %v184, 2147483648
  %v189 = vmul.f32 %v187, 1.442695
  %v190 = vpow.pop %v189
  %v191 = vmul.f32 %v188, 1.442695
  %v192 = vpow.pop %v191
  %v193 = vadd.f32 %v190, 1.0
  %v194 = vadd.f32 %v192, 1.0
  %v195 = vrcp.pop %v193
  %v196 = vmul.f32 1.0, %v195
  %v197 = vrcp.pop %v194
  %v198 = vmul.f32 1.0, %v197
  %v199 = vmul.f32 %v181, %v196
  %v200 = vmul.f32 %v184, %v198
  %v201 = vpack.c.bf16 %v200, %v199
  %v202 = vld [vmem:[%s5] sm:$0xf]
  %v203 = vld [vmem:[%s5 + $0x4] sm:$0xf]
  %v204 = vld [vmem:[%s5 + $0x8] sm:$0xf]
  %v205 = vld [vmem:[%s5 + $0xc] sm:$0xf]
  %v206 = vld [vmem:[%s5 + $0x10] sm:$0xf]
  %v207 = vld [vmem:[%s5 + $0x14] sm:$0xf]
  %v208 = vld [vmem:[%s5 + $0x18] sm:$0xf]
  %v209 = vld [vmem:[%s5 + $0x1c] sm:$0xf]
  %v210 = vld [vmem:[%s5 + $0x20] sm:$0xf]
  %v211 = vld [vmem:[%s5 + $0x24] sm:$0xf]
  %v212 = vld [vmem:[%s5 + $0x28] sm:$0xf]
  %v213 = vld [vmem:[%s5 + $0x2c] sm:$0xf]
  %v214 = vld [vmem:[%s5 + $0x30] sm:$0xf]
  %v215 = vld [vmem:[%s5 + $0x34] sm:$0xf]
  %v216 = vld [vmem:[%s5 + $0x38] sm:$0xf]
  %v217 = vld [vmem:[%s5 + $0x3c] sm:$0xf]
  %v218 = vld [vmem:[%s6] sm:$0x1]
  %v220 = vlaneseq
  %v221 = vshrl.u32 %v220, 7
  %v222 = vsub.s32 0, %v221
  %v223 = vrot.slane %v218, %v222
  %v241 = vunpack.c.l.b16 %v202
  %v242 = vunpack.c.l.b16 %v203
  %v243 = vunpack.c.l.b16 %v204
  %v244 = vunpack.c.l.b16 %v205
  %v245 = vunpack.c.l.b16 %v206
  %v246 = vunpack.c.l.b16 %v207
  %v247 = vunpack.c.l.b16 %v208
  %v248 = vunpack.c.l.b16 %v209
  %v249 = vunpack.c.l.b16 %v210
  %v250 = vunpack.c.l.b16 %v211
  %v251 = vunpack.c.l.b16 %v212
  %v252 = vunpack.c.l.b16 %v213
  %v253 = vunpack.c.l.b16 %v214
  %v254 = vunpack.c.l.b16 %v215
  %v255 = vunpack.c.l.b16 %v216
  %v256 = vunpack.c.l.b16 %v217
  %v257 = vpack.c.b16 %v242, %v241
  %v258 = vpack.c.b16 %v244, %v243
  %v259 = vpack.c.b16 %v246, %v245
  %v260 = vpack.c.b16 %v248, %v247
  %v261 = vpack.c.b16 %v250, %v249
  %v262 = vpack.c.b16 %v252, %v251
  %v263 = vpack.c.b16 %v254, %v253
  %v264 = vpack.c.b16 %v256, %v255
  %273 = vmatprep.subr.bf16.mxu0 0
  %274 = vmatpush1.bf16.msra.mxu0 %v257
  %275 = vmatprep.subr.bf16.mxu0 0
  %276 = vmatpush1.bf16.msra.mxu0 %v258
  %277 = vmatprep.subr.bf16.mxu0 0
  %278 = vmatpush1.bf16.msra.mxu0 %v259
  %279 = vmatprep.subr.bf16.mxu0 0
  %280 = vmatpush1.bf16.msra.mxu0 %v260
  %281 = vmatprep.subr.bf16.mxu0 0
  %282 = vmatpush1.bf16.msra.mxu0 %v261
  %283 = vmatprep.subr.bf16.mxu0 0
  %284 = vmatpush1.bf16.msra.mxu0 %v262
  %285 = vmatprep.subr.bf16.mxu0 0
  %286 = vmatpush1.bf16.msra.mxu0 %v263
  %287 = vmatprep.subr.bf16.mxu0 0
  %288 = vmatpush1.bf16.msra.mxu0 %v264
  %289 = vmatprep.subr.bf16.mxu0 0
  %290 = vmatpush1.bf16.msra.mxu0 0
  %291 = vmatprep.subr.bf16.mxu0 0
  %292 = vmatpush1.bf16.msra.mxu0 0
  %293 = vmatprep.subr.bf16.mxu0 0
  %294 = vmatpush1.bf16.msra.mxu0 0
  %295 = vmatprep.subr.bf16.mxu0 0
  %296 = vmatpush1.bf16.msra.mxu0 0
  %297 = vmatprep.subr.bf16.mxu0 0
  %298 = vmatpush1.bf16.msra.mxu0 0
  %299 = vmatprep.subr.bf16.mxu0 0
  %300 = vmatpush1.bf16.msra.mxu0 0
  %301 = vmatprep.subr.bf16.mxu0 0
  %302 = vmatpush1.bf16.msra.mxu0 0
  %303 = vmatprep.subr.bf16.mxu0 0
  %304 = vmatpush1.bf16.msra.mxu0 0
  %305 = vmatprep.mubr.bf16.mxu0 0
  %306 = vmatmul.mubr.bf16.gmra.mrb[0].mxu0 %v201
  %v307 = vpop.f32.mrb[0].mxu0
  %v308 = vadd.f32 %v223, %v307
  %v309 = vpop.f32.mrb[0].mxu0
  %v310 = vpop.f32.mrb[0].mxu0
  %v311 = vadd.f32 %v223, %v310
  %v312 = vpop.f32.mrb[0].mxu0
  %313 = vdwg.mxu0
  %314 = vst [vmem:[%s7] sm:$0xff] %v308
  %315 = vst [vmem:[%s7 + $0x8] sm:$0xff] %v311
  // Predicated region
  $region30: #{_ffn_impl.1} parent=0 // pred_check
    _
  $region31: #{_ffn_impl.1} parent=0 // pred_check_branch
    %317 = sbr.rel (0) target = $region33
  $region32: #{_ffn_impl.1} parent=0 // pred_region
    _
  $region33: #{_ffn_impl.1} parent=0 // pred_fallthru
    _
  // Predicated region
  $region34: #{_ffn_impl.1} parent=0 // pred_check
    _
  $region35: #{_ffn_impl.1} parent=0 // pred_check_branch
    %319 = sbr.rel (0) target = $region37
  $region36: #{_ffn_impl.1} parent=0 // pred_region
    _
  $region37: #{_ffn_impl.1} parent=0 // pred_fallthru
    _

// kernel: _ffn_impl.1
$region0: #{_ffn_impl.1}
  #allocation0 [shape = 'u32[]', space=smem, size = 0x4, offset = 0x4, fixed_abs, tag = 'smem constant byte address 0x4 - core index']
  #allocation1 [shape = 'u32[144,128]{1,0:T(1,128)}', space=vmem, size = 0x12000, scoped, tag = 'internal scratch']
  %s0 = inlined_call_operand.vmem [shape: f32[16,128], index: 0, kind: input, shape index: {}]
  %s1 = inlined_call_operand.vmem [shape: f32[1,128], index: 1, kind: input, shape index: {}]
  %s2 = inlined_call_operand.vmem [shape: f32[1,128], index: 2, kind: input, shape index: {}]
  %s3 = inlined_call_operand.vmem [shape: bf16[128,128], index: 3, kind: input, shape index: {}]
  %s4 = inlined_call_operand.vmem [shape: f32[1,128], index: 4, kind: input, shape index: {}]
  %s5 = inlined_call_operand.vmem [shape: bf16[128,128], index: 5, kind: input, shape index: {}]
  %s6 = inlined_call_operand.vmem [shape: f32[1,128], index: 6, kind: input, shape index: {}]
  %s7 = inlined_call_operand.vmem [shape: f32[16,128], index: 7, kind: output, shape index: {}]
  %s8 = sld [smem:[#allocation0]]
  $region38: #{_ffn_impl.1} parent=0
    _
  %s10 = ssub.s32 1, %s8
  %s11 = scalar_select 0, %s10, %s8
  // Predicated region
  $region2: #{_ffn_impl.1} parent=0 // pred_check
    _
  $region3: #{_ffn_impl.1} parent=0 // pred_check_branch
    %13 = sbr.rel (0) target = $region5
  $region4: #{_ffn_impl.1} parent=0 // pred_region
    _
  $region5: #{_ffn_impl.1} parent=0 // pred_fallthru
    _
  // Predicated region
  $region6: #{_ffn_impl.1} parent=0 // pred_check
    _
  $region7: #{_ffn_impl.1} parent=0 // pred_check_branch
    %15 = sbr.rel (0) target = $region9
  $region8: #{_ffn_impl.1} parent=0 // pred_region
    _
  $region9: #{_ffn_impl.1} parent=0 // pred_fallthru
    _
  // Predicated region
  $region10: #{_ffn_impl.1} parent=0 // pred_check
    _
  $region11: #{_ffn_impl.1} parent=0 // pred_check_branch
    %17 = sbr.rel (0) target = $region13
  $region12: #{_ffn_impl.1} parent=0 // pred_region
    _
  $region13: #{_ffn_impl.1} parent=0 // pred_fallthru
    _
  // Predicated region
  $region14: #{_ffn_impl.1} parent=0 // pred_check
    _
  $region15: #{_ffn_impl.1} parent=0 // pred_check_branch
    %19 = sbr.rel (0) target = $region17
  $region16: #{_ffn_impl.1} parent=0 // pred_region
    _
  $region17: #{_ffn_impl.1} parent=0 // pred_fallthru
    _
  // Predicated region
  $region18: #{_ffn_impl.1} parent=0 // pred_check
    _
  $region19: #{_ffn_impl.1} parent=0 // pred_check_branch
    %21 = sbr.rel (0) target = $region21
  $region20: #{_ffn_impl.1} parent=0 // pred_region
    _
  $region21: #{_ffn_impl.1} parent=0 // pred_fallthru
    _
  // Predicated region
  $region22: #{_ffn_impl.1} parent=0 // pred_check
    _
  $region23: #{_ffn_impl.1} parent=0 // pred_check_branch
    %23 = sbr.rel (0) target = $region25
  $region24: #{_ffn_impl.1} parent=0 // pred_region
    _
  $region25: #{_ffn_impl.1} parent=0 // pred_fallthru
    _
  // Predicated region
  $region26: #{_ffn_impl.1} parent=0 // pred_check
    _
  $region27: #{_ffn_impl.1} parent=0 // pred_check_branch
    %25 = sbr.rel (0) target = $region29
  $region28: #{_ffn_impl.1} parent=0 // pred_region
    _
  $region29: #{_ffn_impl.1} parent=0 // pred_fallthru
    _
  %v27 = vld [vmem:[%s0] sm:$0xff]
  %v28 = vld [vmem:[%s0 + $0x8] sm:$0xff]
  %29 = vadd.xlane.f32.xlu0 %v27
  %v30 = vpop.xlane.xlu0 %29
  %31 = vadd.xlane.f32.xlu0 %v28
  %v32 = vpop.xlane.xlu0 %31
  %v33 = vmul.f32 %v30, 0.03125
  %v34 = vmul.f32 %v32, 0.03125
  %v35 = vsub.f32 %v27, %v33
  %v36 = vsub.f32 %v28, %v34
  %v37 = vlaneseq
  %v38 = vand.u32 %v37, 127
  %vm39 = vcmp.lt.s32.totalorder %v38, 32
  %v40 = vsel %vm39, %v35, 0.0
  %v41 = vsel %vm39, %v36, 0.0
  %v42 = vmul.f32 %v40, %v40
  %v43 = vmul.f32 %v41, %v41
  %44 = vadd.xlane.f32.xlu0 %v42
  %v45 = vpop.xlane.xlu0 %44
  %46 = vadd.xlane.f32.xlu0 %v43
  %v47 = vpop.xlane.xlu0 %46
  %v48 = vmul.f32 %v45, 0.03125
  %v49 = vmul.f32 %v47, 0.03125
  %v50 = vadd.f32 %v48, 1e-05
  %v51 = vadd.f32 %v49, 1e-05
  %v52 = vrsqrt.pop %v50
  %v53 = vrsqrt.pop %v51
  %v54 = vmul.f32 %v40, %v52
  %v55 = vmul.f32 %v41, %v53
  %v56 = vld [vmem:[%s1] sm:$0x1]
  %v58 = vlaneseq
  %v59 = vshrl.u32 %v58, 7
  %v60 = vsub.s32 0, %v59
  %v61 = vrot.slane %v56, %v60
  %v63 = vmul.f32 %v54, %v61
  %v64 = vmul.f32 %v55, %v61
  %v65 = vld [vmem:[%s2] sm:$0x1]
  %v67 = vlaneseq
  %v68 = vshrl.u32 %v67, 7
  %v69 = vsub.s32 0, %v68
  %v70 = vrot.slane %v65, %v69
  %v72 = vadd.f32 %v63, %v70
  %v73 = vadd.f32 %v64, %v70
  %v74 = vpack.c.bf16 %v73, %v72
  %v75 = vld [vmem:[%s3] sm:$0xf]
  %v76 = vld [vmem:[%s3 + $0x4] sm:$0xf]
  %v77 = vld [vmem:[%s3 + $0x8] sm:$0xf]
  %v78 = vld [vmem:[%s3 + $0xc] sm:$0xf]
  %v79 = vld [vmem:[%s3 + $0x10] sm:$0xf]
  %v80 = vld [vmem:[%s3 + $0x14] sm:$0xf]
  %v81 = vld [vmem:[%s3 + $0x18] sm:$0xf]
  %v82 = vld [vmem:[%s3 + $0x1c] sm:$0xf]
  %v83 = vld [vmem:[%s3 + $0x20] sm:$0xf]
  %v84 = vld [vmem:[%s3 + $0x24] sm:$0xf]
  %v85 = vld [vmem:[%s3 + $0x28] sm:$0xf]
  %v86 = vld [vmem:[%s3 + $0x2c] sm:$0xf]
  %v87 = vld [vmem:[%s3 + $0x30] sm:$0xf]
  %v88 = vld [vmem:[%s3 + $0x34] sm:$0xf]
  %v89 = vld [vmem:[%s3 + $0x38] sm:$0xf]
  %v90 = vld [vmem:[%s3 + $0x3c] sm:$0xf]
  %v91 = vld [vmem:[%s4] sm:$0x1]
  %v93 = vlaneseq
  %v94 = vshrl.u32 %v93, 7
  %v95 = vsub.s32 0, %v94
  %v96 = vrot.slane %v91, %v95
  %v114 = vunpack.c.l.b16 %v75
  %v115 = vunpack.c.l.b16 %v76
  %v116 = vunpack.c.l.b16 %v77
  %v117 = vunpack.c.l.b16 %v78
  %v118 = vunpack.c.l.b16 %v79
  %v119 = vunpack.c.l.b16 %v80
  %v120 = vunpack.c.l.b16 %v81
  %v121 = vunpack.c.l.b16 %v82
  %v122 = vunpack.c.l.b16 %v83
  %v123 = vunpack.c.l.b16 %v84
  %v124 = vunpack.c.l.b16 %v85
  %v125 = vunpack.c.l.b16 %v86
  %v126 = vunpack.c.l.b16 %v87
  %v127 = vunpack.c.l.b16 %v88
  %v128 = vunpack.c.l.b16 %v89
  %v129 = vunpack.c.l.b16 %v90
  %v130 = vpack.c.b16 %v115, %v114
  %v131 = vpack.c.b16 %v117, %v116
  %v132 = vpack.c.b16 %v119, %v118
  %v133 = vpack.c.b16 %v121, %v120
  %v134 = vpack.c.b16 %v123, %v122
  %v135 = vpack.c.b16 %v125, %v124
  %v136 = vpack.c.b16 %v127, %v126
  %v137 = vpack.c.b16 %v129, %v128
  %146 = vmatprep.subr.bf16.mxu0 0
  %147 = vmatpush1.bf16.msra.mxu0 %v130
  %148 = vmatprep.subr.bf16.mxu0 0
  %149 = vmatpush1.bf16.msra.mxu0 %v131
  %150 = vmatprep.subr.bf16.mxu0 0
  %151 = vmatpush1.bf16.msra.mxu0 %v132
  %152 = vmatprep.subr.bf16.mxu0 0
  %153 = vmatpush1.bf16.msra.mxu0 %v133
  %154 = vmatprep.subr.bf16.mxu0 0
  %155 = vmatpush1.bf16.msra.mxu0 %v134
  %156 = vmatprep.subr.bf16.mxu0 0
  %157 = vmatpush1.bf16.msra.mxu0 %v135
  %158 = vmatprep.subr.bf16.mxu0 0
  %159 = vmatpush1.bf16.msra.mxu0 %v136
  %160 = vmatprep.subr.bf16.mxu0 0
  %161 = vmatpush1.bf16.msra.mxu0 %v137
  %162 = vmatprep.subr.bf16.mxu0 0
  %163 = vmatpush1.bf16.msra.mxu0 0
  %164 = vmatprep.subr.bf16.mxu0 0
  %165 = vmatpush1.bf16.msra.mxu0 0
  %166 = vmatprep.subr.bf16.mxu0 0
  %167 = vmatpush1.bf16.msra.mxu0 0
  %168 = vmatprep.subr.bf16.mxu0 0
  %169 = vmatpush1.bf16.msra.mxu0 0
  %170 = vmatprep.subr.bf16.mxu0 0
  %171 = vmatpush1.bf16.msra.mxu0 0
  %172 = vmatprep.subr.bf16.mxu0 0
  %173 = vmatpush1.bf16.msra.mxu0 0
  %174 = vmatprep.subr.bf16.mxu0 0
  %175 = vmatpush1.bf16.msra.mxu0 0
  %176 = vmatprep.subr.bf16.mxu0 0
  %177 = vmatpush1.bf16.msra.mxu0 0
  %178 = vmatprep.mubr.bf16.mxu0 0
  %179 = vmatmul.mubr.bf16.gmra.mrb[0].mxu0 %v74
  %v180 = vpop.f32.mrb[0].mxu0
  %v181 = vadd.f32 %v96, %v180
  %v182 = vpop.f32.mrb[0].mxu0
  %v183 = vpop.f32.mrb[0].mxu0
  %v184 = vadd.f32 %v96, %v183
  %v185 = vpop.f32.mrb[0].mxu0
  %186 = vdwg.mxu0
  %v187 = vxor.u32 %v181, 2147483648
  %v188 = vxor.u32 %v184, 2147483648
  %v189 = vmul.f32 %v187, 1.442695
  %v190 = vpow.pop %v189
  %v191 = vmul.f32 %v188, 1.442695
  %v192 = vpow.pop %v191
  %v193 = vadd.f32 %v190, 1.0
  %v194 = vadd.f32 %v192, 1.0
  %v195 = vrcp.pop %v193
  %v196 = vmul.f32 1.0, %v195
  %v197 = vrcp.pop %v194
  %v198 = vmul.f32 1.0, %v197
  %v199 = vmul.f32 %v181, %v196
  %v200 = vmul.f32 %v184, %v198
  %v201 = vpack.c.bf16 %v200, %v199
  %v202 = vld [vmem:[%s5] sm:$0xf]
  %v203 = vld [vmem:[%s5 + $0x4] sm:$0xf]
  %v204 = vld [vmem:[%s5 + $0x8] sm:$0xf]
  %v205 = vld [vmem:[%s5 + $0xc] sm:$0xf]
  %v206 = vld [vmem:[%s5 + $0x10] sm:$0xf]
  %v207 = vld [vmem:[%s5 + $0x14] sm:$0xf]
  %v208 = vld [vmem:[%s5 + $0x18] sm:$0xf]
  %v209 = vld [vmem:[%s5 + $0x1c] sm:$0xf]
  %v210 = vld [vmem:[%s5 + $0x20] sm:$0xf]
  %v211 = vld [vmem:[%s5 + $0x24] sm:$0xf]
  %v212 = vld [vmem:[%s5 + $0x28] sm:$0xf]
  %v213 = vld [vmem:[%s5 + $0x2c] sm:$0xf]
  %v214 = vld [vmem:[%s5 + $0x30] sm:$0xf]
  %v215 = vld [vmem:[%s5 + $0x34] sm:$0xf]
  %v216 = vld [vmem:[%s5 + $0x38] sm:$0xf]
  %v217 = vld [vmem:[%s5 + $0x3c] sm:$0xf]
  %v218 = vld [vmem:[%s6] sm:$0x1]
  %v220 = vlaneseq
  %v221 = vshrl.u32 %v220, 7
  %v222 = vsub.s32 0, %v221
  %v223 = vrot.slane %v218, %v222
  %v241 = vunpack.c.l.b16 %v202
  %v242 = vunpack.c.l.b16 %v203
  %v243 = vunpack.c.l.b16 %v204
  %v244 = vunpack.c.l.b16 %v205
  %v245 = vunpack.c.l.b16 %v206
  %v246 = vunpack.c.l.b16 %v207
  %v247 = vunpack.c.l.b16 %v208
  %v248 = vunpack.c.l.b16 %v209
  %v249 = vunpack.c.l.b16 %v210
  %v250 = vunpack.c.l.b16 %v211
  %v251 = vunpack.c.l.b16 %v212
  %v252 = vunpack.c.l.b16 %v213
  %v253 = vunpack.c.l.b16 %v214
  %v254 = vunpack.c.l.b16 %v215
  %v255 = vunpack.c.l.b16 %v216
  %v256 = vunpack.c.l.b16 %v217
  %v257 = vpack.c.b16 %v242, %v241
  %v258 = vpack.c.b16 %v244, %v243
  %v259 = vpack.c.b16 %v246, %v245
  %v260 = vpack.c.b16 %v248, %v247
  %v261 = vpack.c.b16 %v250, %v249
  %v262 = vpack.c.b16 %v252, %v251
  %v263 = vpack.c.b16 %v254, %v253
  %v264 = vpack.c.b16 %v256, %v255
  %273 = vmatprep.subr.bf16.mxu0 0
  %274 = vmatpush1.bf16.msra.mxu0 %v257
  %275 = vmatprep.subr.bf16.mxu0 0
  %276 = vmatpush1.bf16.msra.mxu0 %v258
  %277 = vmatprep.subr.bf16.mxu0 0
  %278 = vmatpush1.bf16.msra.mxu0 %v259
  %279 = vmatprep.subr.bf16.mxu0 0
  %280 = vmatpush1.bf16.msra.mxu0 %v260
  %281 = vmatprep.subr.bf16.mxu0 0
  %282 = vmatpush1.bf16.msra.mxu0 %v261
  %283 = vmatprep.subr.bf16.mxu0 0
  %284 = vmatpush1.bf16.msra.mxu0 %v262
  %285 = vmatprep.subr.bf16.mxu0 0
  %286 = vmatpush1.bf16.msra.mxu0 %v263
  %287 = vmatprep.subr.bf16.mxu0 0
  %288 = vmatpush1.bf16.msra.mxu0 %v264
  %289 = vmatprep.subr.bf16.mxu0 0
  %290 = vmatpush1.bf16.msra.mxu0 0
  %291 = vmatprep.subr.bf16.mxu0 0
  %292 = vmatpush1.bf16.msra.mxu0 0
  %293 = vmatprep.subr.bf16.mxu0 0
  %294 = vmatpush1.bf16.msra.mxu0 0
  %295 = vmatprep.subr.bf16.mxu0 0
  %296 = vmatpush1.bf16.msra.mxu0 0
  %297 = vmatprep.subr.bf16.mxu0 0
  %298 = vmatpush1.bf16.msra.mxu0 0
  %299 = vmatprep.subr.bf16.mxu0 0
  %300 = vmatpush1.bf16.msra.mxu0 0
  %301 = vmatprep.subr.bf16.mxu0 0
  %302 = vmatpush1.bf16.msra.mxu0 0
  %303 = vmatprep.subr.bf16.mxu0 0
  %304 = vmatpush1.bf16.msra.mxu0 0
  %305 = vmatprep.mubr.bf16.mxu0 0
  %306 = vmatmul.mubr.bf16.gmra.mrb[0].mxu0 %v201
  %v307 = vpop.f32.mrb[0].mxu0
  %v308 = vadd.f32 %v223, %v307
  %v309 = vpop.f32.mrb[0].mxu0
  %v310 = vpop.f32.mrb[0].mxu0
  %v311 = vadd.f32 %v223, %v310
  %v312 = vpop.f32.mrb[0].mxu0
  %313 = vdwg.mxu0
  %314 = vst [vmem:[%s7] sm:$0xff] %v308
  %315 = vst [vmem:[%s7 + $0x8] sm:$0xff] %v311
  // Predicated region
  $region30: #{_ffn_impl.1} parent=0 // pred_check
    _
  $region31: #{_ffn_impl.1} parent=0 // pred_check_branch
    %317 = sbr.rel (0) target = $region33
  $region32: #{_ffn_impl.1} parent=0 // pred_region
    _
  $region33: #{_ffn_impl.1} parent=0 // pred_fallthru
    _
  // Predicated region
  $region34: #{_ffn_impl.1} parent=0 // pred_check
    _
  $region35: #{_ffn_impl.1} parent=0 // pred_check_branch
    %319 = sbr.rel (0) target = $region37
  $region36: #{_ffn_impl.1} parent=0 // pred_region
    _
  $region37: #{_ffn_impl.1} parent=0 // pred_fallthru
    _

</llo_original>
